<compile_context>
chip_gen: v7x
topology: tpu7x:2x2x1
jax: 0.10.0
libtpu: 0.0.40
codegen_flags: <defaults>
</compile_context>

<pallas_src>
import jax
import jax.numpy as jnp
from jax.experimental import pallas as pl
from jax.experimental.pallas import tpu as pltpu


def _round_up(x, m):
    return ((x + m - 1) // m) * m


# ---------------------------------------------------------------------------
# Encoder kernel: 3x3 conv (as one MXU matmul per row-chunk) + LeakyReLU +
# global-average-pool accumulation + linear style head at the last step.
# The grid streams HW row-chunks of the im2col patches; `pooled_acc` is the
# resident f32 accumulator, so this axis must be "arbitrary".
# ---------------------------------------------------------------------------
def _encoder_kernel(patches_ref, wc_ref, bc_ref, ws_ref, bs_ref,
                    instyle_ref, styles_q_ref, pooled_acc):
    i = pl.program_id(0)

    @pl.when(i == 0)
    def _():
        pooled_acc[...] = jnp.zeros_like(pooled_acc)

    p = patches_ref[...]                               # (B, R, Kp) bf16 chunk
    b, r, k = p.shape
    # conv as a lane-dense 2-D MXU matmul: (B*R, Kp) @ (Kp, C1), bf16 in / f32 acc.
    feat = jnp.dot(p.reshape(b * r, k), wc_ref[...],
                   preferred_element_type=jnp.float32)         # (B*R, C1) f32
    feat = feat + bc_ref[...]
    feat = jnp.where(feat > 0, feat, 0.2 * feat)               # LeakyReLU(0.2), f32
    # global average pool: the 1/(H*W) scale is folded into ws, so only a sum here.
    pooled_acc[...] += jnp.sum(feat.reshape(b, r, -1), axis=1)  # (B, C1)

    @pl.when(i == pl.num_programs(0) - 1)
    def _():
        styles = jnp.dot(pooled_acc[...], ws_ref[...],
                         preferred_element_type=jnp.float32) + bs_ref[...]
        instyle_ref[...] = styles                        # z+ latents, f32
        styles_q_ref[...] = styles.astype(jnp.bfloat16)  # bf16 copy for decoder MXU


# ---------------------------------------------------------------------------
# Decoder kernel: one PIX tile per grid step ("parallel" -> shards across both
# v7x TensorCores).  wd streams from HBM as int8 (halves the binding HBM
# stream); per-column dequant scale is applied after the f32 accumulate.
# ---------------------------------------------------------------------------
def _decoder_kernel(styles_ref, wd_ref, scale_ref, bd_ref, img_ref):
    # int8 codes -> bf16 for the MXU (via f32; both casts are cheap VPU ops).
    w = wd_ref[...].astype(jnp.float32).astype(jnp.bfloat16)
    acc = jnp.dot(styles_ref[...], w,
                  preferred_element_type=jnp.float32)          # (B, TILE_N) f32
    img = acc * scale_ref[...] + bd_ref[...]                   # dequant + bias
    img_ref[...] = jnp.clip(img, -1.0, 1.0)                    # torch.clamp(img_rec, -1, 1)


# ---------------------------------------------------------------------------
# Wrapper
# ---------------------------------------------------------------------------
def psp_encoder_forward(x, params):
    """x: [B, 3, H, W] float32 (NCHW). Returns (img_rec [B,3,H,W], instyle [B,n_styles,style_dim])."""
    B, C, H, W = x.shape
    HW = H * W
    wc, bc, ws, bs = params["wc"], params["bc"], params["ws"], params["bs"]
    wd, wd_scale, bd = params["wd"], params["wd_scale"], params["bd"]
    Kp, C1 = wc.shape            # Kp = 9*C rounded up to 32 only (no 128 lane pad)
    SD = ws.shape[1]             # n_styles * style_dim
    PIXp = wd.shape[1]           # padded 3*H*W (multiple of tile_n)
    PIX = 3 * H * W
    tile_n = params["tile_n"]
    assert PIXp % tile_n == 0 and tile_n % 128 == 0

    # glue: NHWC im2col (3x3, stride 1, SAME), tap-major / channel-minor so the
    # K axis is lane-contiguous; pad K only to 32; bf16 for the MXU.
    xh = jnp.transpose(x, (0, 2, 3, 1))                                # [B, H, W, C]
    xp = jnp.pad(xh, ((0, 0), (1, 1), (1, 1), (0, 0)))
    taps = [xp[:, dy:dy + H, dx:dx + W, :] for dy in range(3) for dx in range(3)]
    patches = jnp.concatenate(taps, axis=-1).reshape(B, HW, 9 * C)     # [B, HW, 9C]
    patches = jnp.pad(patches, ((0, 0), (0, 0), (0, Kp - 9 * C))).astype(jnp.bfloat16)

    # --- encoder + style head: grid streams HW row-chunks (bounded live ranges,
    #     patches never fully resident) ---------------------------------------
    row_chunk = HW if HW <= 512 else 512
    assert HW % row_chunk == 0
    instyle_flat, styles_bf16 = pl.pallas_call(
        _encoder_kernel,
        grid=(HW // row_chunk,),
        in_specs=[
            pl.BlockSpec((B, row_chunk, Kp), lambda i: (0, i, 0)),  # patches (streamed)
            pl.BlockSpec((Kp, C1), lambda i: (0, 0)),               # wc (resident)
            pl.BlockSpec((1, C1), lambda i: (0, 0)),                # bc
            pl.BlockSpec((C1, SD), lambda i: (0, 0)),               # ws (includes 1/HW)
            pl.BlockSpec((1, SD), lambda i: (0, 0)),                # bs
        ],
        out_specs=[
            pl.BlockSpec((B, SD), lambda i: (0, 0)),                # instyle f32
            pl.BlockSpec((B, SD), lambda i: (0, 0)),                # styles bf16
        ],
        out_shape=[
            jax.ShapeDtypeStruct((B, SD), jnp.float32),
            jax.ShapeDtypeStruct((B, SD), jnp.bfloat16),
        ],
        scratch_shapes=[pltpu.VMEM((B, C1), jnp.float32)],          # pooled accumulator
        compiler_params=pltpu.CompilerParams(
            dimension_semantics=("arbitrary",),   # carries pooled_acc across chunks
        ),
    )(patches, wc, bc, ws, bs)

    # --- decoder: PIX-tiled, independent tiles -> "parallel" (both v7x TCs) ---
    img_flat = pl.pallas_call(
        _decoder_kernel,
        grid=(PIXp // tile_n,),
        in_specs=[
            pl.BlockSpec((B, SD), lambda j: (0, 0)),                # styles (resident)
            pl.BlockSpec((SD, tile_n), lambda j: (0, j)),           # wd int8 (streamed)
            pl.BlockSpec((1, tile_n), lambda j: (0, j)),            # per-column scale
            pl.BlockSpec((1, tile_n), lambda j: (0, j)),            # bd
        ],
        out_specs=pl.BlockSpec((B, tile_n), lambda j: (0, j)),
        out_shape=jax.ShapeDtypeStruct((B, PIXp), jnp.float32),
        compiler_params=pltpu.CompilerParams(
            dimension_semantics=("parallel",),
        ),
    )(styles_bf16, wd, wd_scale, bd)

    n_styles, style_dim = params["n_styles"], params["style_dim"]
    instyle = instyle_flat.reshape(B, n_styles, style_dim)   # z+ latents
    img_rec = img_flat[:, :PIX].reshape(B, 3, H, W)          # NCHW, already clamped
    return img_rec, instyle


def init_params(key, *, in_ch=3, hidden=32, n_styles=8, style_dim=32, H=16, W=16):
    k1, k2, k3 = jax.random.split(key, 3)
    K = in_ch * 9
    Kp = _round_up(K, 32)                   # tiny sublane pad only; no 128 lane pad in HBM
    SD = n_styles * style_dim               # 256 (multiple of 128)
    PIX = 3 * H * W
    # decoder tile width: single grid step when PIX is small, 2048-wide otherwise.
    tile_n = _round_up(PIX, 128) if PIX <= 2048 else 2048
    PIXp = _round_up(PIX, tile_n)

    wc = jax.random.normal(k1, (K, hidden), jnp.float32) * (1.0 / K ** 0.5)
    ws = jax.random.normal(k2, (hidden, SD), jnp.float32) * (1.0 / hidden ** 0.5)
    wd = jax.random.normal(k3, (SD, PIX), jnp.float32) * (4.0 / SD ** 0.5)

    # wc rows are ordered (kh, kw, cin)-major to match the tap-major/channel-minor
    # im2col; a real PyTorch conv weight (Cout, Cin, 3, 3) would map via
    # weight.permute(2, 3, 1, 0).reshape(9*Cin, Cout).
    wc_p = jnp.zeros((Kp, hidden), jnp.float32).at[:K, :].set(wc).astype(jnp.bfloat16)
    # fold the global-average-pool 1/(H*W) scale into ws (kernel only sums).
    ws_p = ws / float(H * W)

    # int8 weight quantization of wd with a per-column scale (applied after the
    # f32 accumulate in the decoder kernel) -> halves the binding HBM stream.
    wd_f = jnp.zeros((SD, PIXp), jnp.float32).at[:, :PIX].set(wd)
    col_max = jnp.max(jnp.abs(wd_f), axis=0, keepdims=True)            # (1, PIXp)
    wd_scale = jnp.where(col_max > 0, col_max / 127.0, 1.0)
    wd_q = jnp.clip(jnp.round(wd_f / wd_scale), -127, 127).astype(jnp.int8)

    return {
        "wc": wc_p,                                 # [Kp, hidden]  bf16
        "bc": jnp.zeros((1, hidden), jnp.float32),
        "ws": ws_p,                                 # [hidden, SD]  f32 (incl. 1/HW)
        "bs": jnp.zeros((1, SD), jnp.float32),
        "wd": wd_q,                                 # [SD, PIXp]    int8 (streamed)
        "wd_scale": wd_scale,                       # [1, PIXp]     f32 dequant scale
        "bd": jnp.zeros((1, PIXp), jnp.float32),
        "n_styles": n_styles,
        "style_dim": style_dim,
        "tile_n": tile_n,
    }


if __name__ == "__main__":
    # NOTE: B>=8 per call amortizes the wd HBM stream at real sizes; B=2 here
    # only to keep the toy example small.
    B, C, H, W = 2, 3, 16, 16
    key = jax.random.PRNGKey(0)
    kx, kp = jax.random.split(key)
    x = jax.random.uniform(kx, (B, C, H, W), jnp.float32, minval=-1.0, maxval=1.0)
    params = init_params(kp, in_ch=C, H=H, W=W)

    img_rec, instyle = psp_encoder_forward(x, params)
    jax.block_until_ready((img_rec, instyle))

    assert img_rec.shape == (B, 3, H, W)
    assert instyle.shape == (B, params["n_styles"], params["style_dim"])
    assert float(img_rec.max()) <= 1.0 + 1e-6 and float(img_rec.min()) >= -1.0 - 1e-6
    print("KERNEL_OK")
</pallas_src>

<mosaic_0001>
module attributes {stable_mosaic.version = 11 : i64} {
  func.func @_encoder_kernel(%arg0: i32, %arg1: memref<2x256x32xbf16, #tpu.memory_space<vmem>>, %arg2: memref<32x32xbf16, #tpu.memory_space<vmem>>, %arg3: memref<1x32xf32, #tpu.memory_space<vmem>>, %arg4: memref<32x256xf32, #tpu.memory_space<vmem>>, %arg5: memref<1x256xf32, #tpu.memory_space<vmem>>, %arg6: memref<2x256xf32, #tpu.memory_space<vmem>>, %arg7: memref<2x256xbf16, #tpu.memory_space<vmem>>, %arg8: memref<2x32xf32, #tpu.memory_space<vmem>>) attributes {dimension_semantics = [#tpu.dimension_semantics<arbitrary>], iteration_bounds = array<i64: 1>, scalar_prefetch = 0 : i64, scratch_operands = 1 : i64, tpu.core_type = #tpu.core_type<tc>, window_params = [{transform_indices = @transform_0, window_bounds = array<i64: 2, 256, 32>}, {pipeline_mode = #tpu.pipeline_mode<synchronous>, transform_indices = @transform_1, window_bounds = array<i64: 32, 32>}, {pipeline_mode = #tpu.pipeline_mode<synchronous>, transform_indices = @transform_2, window_bounds = array<i64: 1, 32>}, {pipeline_mode = #tpu.pipeline_mode<synchronous>, transform_indices = @transform_3, window_bounds = array<i64: 32, 256>}, {pipeline_mode = #tpu.pipeline_mode<synchronous>, transform_indices = @transform_4, window_bounds = array<i64: 1, 256>}, {pipeline_mode = #tpu.pipeline_mode<synchronous>, transform_indices = @transform_5, window_bounds = array<i64: 2, 256>}, {pipeline_mode = #tpu.pipeline_mode<synchronous>, transform_indices = @transform_6, window_bounds = array<i64: 2, 256>}]} {
    %c0_i32 = arith.constant 0 : i32
    %0 = arith.cmpi eq, %arg0, %c0_i32 : i32
    %1 = arith.extui %0 : i1 to i32
    %c0_i32_0 = arith.constant 0 : i32
    %2 = arith.cmpi ne, %1, %c0_i32_0 : i32
    scf.if %2 {
      %cst_16 = arith.constant 0.000000e+00 : f32
      %23 = vector.broadcast %cst_16 : f32 to vector<2x32xf32>
      %c0_17 = arith.constant 0 : index
      %c0_18 = arith.constant 0 : index
      %24 = vector.load %arg8[%c0_17, %c0_18] : memref<2x32xf32, #tpu.memory_space<vmem>>, vector<2x32xf32>
      tpu.vector_store %arg8[%c0_17, %c0_18], %23 {strides = array<i32>} : memref<2x32xf32, #tpu.memory_space<vmem>>, vector<2x32xf32>,
    } else {
    }
    %c0 = arith.constant 0 : index
    %c0_1 = arith.constant 0 : index
    %c0_2 = arith.constant 0 : index
    %3 = vector.load %arg1[%c0, %c0_1, %c0_2] : memref<2x256x32xbf16, #tpu.memory_space<vmem>>, vector<2x256x32xbf16>
    %4 = vector.shape_cast %3 : vector<2x256x32xbf16> to vector<512x32xbf16>
    %c0_3 = arith.constant 0 : index
    %c0_4 = arith.constant 0 : index
    %5 = vector.load %arg2[%c0_3, %c0_4] : memref<32x32xbf16, #tpu.memory_space<vmem>>, vector<32x32xbf16>
    %cst = arith.constant dense<0.000000e+00> : vector<512x32xf32>
    %6 = tpu.matmul %4, %5, %cst {dimension_numbers = #tpu.dot_dimension_numbers<[1], [0], [0], [1], [0, 0, 1, 1], [], []>} : vector<512x32xbf16>, vector<32x32xbf16>, vector<512x32xf32> -> vector<512x32xf32>
    %c0_5 = arith.constant 0 : index
    %c0_6 = arith.constant 0 : index
    %7 = vector.load %arg3[%c0_5, %c0_6] : memref<1x32xf32, #tpu.memory_space<vmem>>, vector<1x32xf32>
    %8 = vector.broadcast %7 : vector<1x32xf32> to vector<512x32xf32>
    %9 = arith.addf %6, %8 : vector<512x32xf32>
    %cst_7 = arith.constant 0.000000e+00 : f32
    %10 = vector.broadcast %cst_7 : f32 to vector<512x32xf32>
    %11 = arith.cmpf ogt, %9, %10 : vector<512x32xf32>
    %cst_8 = arith.constant 2.000000e-01 : f32
    %12 = vector.broadcast %cst_8 : f32 to vector<512x32xf32>
    %13 = arith.mulf %12, %9 : vector<512x32xf32>
    %14 = arith.select %11, %9, %13 : vector<512x32xi1>, vector<512x32xf32>
    %c0_9 = arith.constant 0 : index
    %c0_10 = arith.constant 0 : index
    %15 = vector.load %arg8[%c0_9, %c0_10] : memref<2x32xf32, #tpu.memory_space<vmem>>, vector<2x32xf32>
    %16 = vector.shape_cast %14 : vector<512x32xf32> to vector<2x256x32xf32>
    %cst_11 = arith.constant dense<0.000000e+00> : vector<2x32xf32>
    %17 = vector.multi_reduction <add>, %16, %cst_11 [1] : vector<2x256x32xf32> to vector<2x32xf32>
    %18 = arith.addf %15, %17 : vector<2x32xf32>
    %c0_12 = arith.constant 0 : index
    %c0_13 = arith.constant 0 : index
    %19 = vector.load %arg8[%c0_12, %c0_13] : memref<2x32xf32, #tpu.memory_space<vmem>>, vector<2x32xf32>
    tpu.vector_store %arg8[%c0_12, %c0_13], %18 {strides = array<i32>} : memref<2x32xf32, #tpu.memory_space<vmem>>, vector<2x32xf32>,
    %c0_i32_14 = arith.constant 0 : i32
    %20 = arith.cmpi eq, %arg0, %c0_i32_14 : i32
    %21 = arith.extui %20 : i1 to i32
    %c0_i32_15 = arith.constant 0 : i32
    %22 = arith.cmpi ne, %21, %c0_i32_15 : i32
    scf.if %22 {
      %c0_16 = arith.constant 0 : index
      %c0_17 = arith.constant 0 : index
      %23 = vector.load %arg8[%c0_16, %c0_17] : memref<2x32xf32, #tpu.memory_space<vmem>>, vector<2x32xf32>
      %c0_18 = arith.constant 0 : index
      %c0_19 = arith.constant 0 : index
      %24 = vector.load %arg4[%c0_18, %c0_19] : memref<32x256xf32, #tpu.memory_space<vmem>>, vector<32x256xf32>
      %cst_20 = arith.constant dense<0.000000e+00> : vector<2x256xf32>
      %25 = tpu.matmul %23, %24, %cst_20 {dimension_numbers = #tpu.dot_dimension_numbers<[1], [0], [0], [1], [0, 0, 1, 1], [], []>} : vector<2x32xf32>, vector<32x256xf32>, vector<2x256xf32> -> vector<2x256xf32>
      %c0_21 = arith.constant 0 : index
      %c0_22 = arith.constant 0 : index
      %26 = vector.load %arg5[%c0_21, %c0_22] : memref<1x256xf32, #tpu.memory_space<vmem>>, vector<1x256xf32>
      %27 = vector.broadcast %26 : vector<1x256xf32> to vector<2x256xf32>
      %28 = arith.addf %25, %27 : vector<2x256xf32>
      %c0_23 = arith.constant 0 : index
      %c0_24 = arith.constant 0 : index
      %29 = vector.load %arg6[%c0_23, %c0_24] : memref<2x256xf32, #tpu.memory_space<vmem>>, vector<2x256xf32>
      tpu.vector_store %arg6[%c0_23, %c0_24], %28 {strides = array<i32>} : memref<2x256xf32, #tpu.memory_space<vmem>>, vector<2x256xf32>,
      %30 = arith.truncf %28 : vector<2x256xf32> to vector<2x256xbf16>
      %c0_25 = arith.constant 0 : index
      %c0_26 = arith.constant 0 : index
      %31 = vector.load %arg7[%c0_25, %c0_26] : memref<2x256xbf16, #tpu.memory_space<vmem>>, vector<2x256xbf16>
      tpu.vector_store %arg7[%c0_25, %c0_26], %30 {strides = array<i32>} : memref<2x256xbf16, #tpu.memory_space<vmem>>, vector<2x256xbf16>,
    } else {
    }
    return
  }
  func.func @transform_0(%arg0: i32) -> (i32, i32, i32) {
    %c0_i32 = arith.constant 0 : i32
    %c0_i32_0 = arith.constant 0 : i32
    %c0_i32_1 = arith.constant 0 : i32
    return %c0_i32, %arg0, %c0_i32_0 : i32, i32, i32
  }
  func.func @transform_1(%arg0: i32) -> (i32, i32) {
    %c0_i32 = arith.constant 0 : i32
    %c0_i32_0 = arith.constant 0 : i32
    %c0_i32_1 = arith.constant 0 : i32
    return %c0_i32, %c0_i32_0 : i32, i32
  }
  func.func @transform_2(%arg0: i32) -> (i32, i32) {
    %c0_i32 = arith.constant 0 : i32
    %c0_i32_0 = arith.constant 0 : i32
    %c0_i32_1 = arith.constant 0 : i32
    return %c0_i32, %c0_i32_0 : i32, i32
  }
  func.func @transform_3(%arg0: i32) -> (i32, i32) {
    %c0_i32 = arith.constant 0 : i32
    %c0_i32_0 = arith.constant 0 : i32
    %c0_i32_1 = arith.constant 0 : i32
    return %c0_i32, %c0_i32_0 : i32, i32
  }
  func.func @transform_4(%arg0: i32) -> (i32, i32) {
    %c0_i32 = arith.constant 0 : i32
    %c0_i32_0 = arith.constant 0 : i32
    %c0_i32_1 = arith.constant 0 : i32
    return %c0_i32, %c0_i32_0 : i32, i32
  }
  func.func @transform_5(%arg0: i32) -> (i32, i32) {
    %c0_i32 = arith.constant 0 : i32
    %c0_i32_0 = arith.constant 0 : i32
    %c0_i32_1 = arith.constant 0 : i32
    return %c0_i32, %c0_i32_0 : i32, i32
  }
  func.func @transform_6(%arg0: i32) -> (i32, i32) {
    %c0_i32 = arith.constant 0 : i32
    %c0_i32_0 = arith.constant 0 : i32
    %c0_i32_1 = arith.constant 0 : i32
    return %c0_i32, %c0_i32_0 : i32, i32
  }
}

</mosaic_0001>

<llo_original>
// kernel: tpu_custom_call.1
$region0: #{tpu_custom_call.1}
  #allocation0 [shape = 'u32[]', space=smem, size = 0x4, offset = 0x4, fixed_abs, tag = 'smem constant byte address 0x4 - core index']
  #allocation1 [shape = 'u32[144,128]{1,0:T(1,128)}', space=vmem, size = 0x12000, scoped, tag = 'internal scratch']
  #allocation2 [shape = 'f32[2,32]{1,0:T(2,128)}', space=vmem, size = 0x400, scoped, tag = 'scratch operand']
  %s0 = inlined_call_operand.vmem [shape: bf16[2,256,32], index: 0, kind: input, shape index: {}]
  %s1 = inlined_call_operand.vmem [shape: bf16[32,32], index: 1, kind: input, shape index: {}]
  %s2 = inlined_call_operand.vmem [shape: f32[1,32], index: 2, kind: input, shape index: {}]
  %s3 = inlined_call_operand.vmem [shape: f32[32,256], index: 3, kind: input, shape index: {}]
  %s4 = inlined_call_operand.vmem [shape: f32[1,256], index: 4, kind: input, shape index: {}]
  %s5 = inlined_call_operand.hbm [shape: f32[2,256], index: 5, kind: output, shape index: {0}]
  %s6 = inlined_call_operand.hbm [shape: bf16[2,256], index: 6, kind: output, shape index: {1}]
  %7 = xla_tuple %s5, %s6
  %s8 = sld [smem:[#allocation0]]
  $region46: #{tpu_custom_call.1} parent=0
    _
  %s10 = ssub.s32 1, %s8
  %s11 = scalar_select 0, %s10, %s8
  $region1: #{tpu_custom_call.1} parent=0
    #allocation3 [shape = 'u8[2048]{0}', space=vmem, size = 0x800, scoped, tag = 'output window, operand 0, single buffered']
    #allocation4 [shape = 's32[1]{0}', space=sflag, size = 0x4, scoped, tag = 'scoped memory for tpu_custom_call.1']
    #allocation5 [shape = 'u8[1024]{0}', space=vmem, size = 0x400, scoped, tag = 'output window, operand 1, single buffered']
    #allocation6 [shape = 's32[1]{0}', space=sflag, size = 0x4, scoped, tag = 'scoped memory for tpu_custom_call.1']
    %12 = vsyncpa [#allocation4], 0
    %13 = vsyncpa [#allocation6], 0
    // Predicated region
    $region2: #{tpu_custom_call.1} parent=1 // pred_check
      _
    $region3: #{tpu_custom_call.1} parent=1 // pred_check_branch
      %15 = sbr.rel (0) target = $region5
    $region4: #{tpu_custom_call.1} parent=1 // pred_region
      _
    $region5: #{tpu_custom_call.1} parent=1 // pred_fallthru
      _
    // Predicated region
    $region6: #{tpu_custom_call.1} parent=1 // pred_check
      _
    $region7: #{tpu_custom_call.1} parent=1 // pred_check_branch
      %17 = sbr.rel (0) target = $region9
    $region8: #{tpu_custom_call.1} parent=1 // pred_region
      _
    $region9: #{tpu_custom_call.1} parent=1 // pred_fallthru
      _
    // Predicated region
    $region10: #{tpu_custom_call.1} parent=1 // pred_check
      _
    $region11: #{tpu_custom_call.1} parent=1 // pred_check_branch
      %19 = sbr.rel (0) target = $region13
    $region12: #{tpu_custom_call.1} parent=1 // pred_region
      _
    $region13: #{tpu_custom_call.1} parent=1 // pred_fallthru
      _
    // Predicated region
    $region14: #{tpu_custom_call.1} parent=1 // pred_check
      _
    $region15: #{tpu_custom_call.1} parent=1 // pred_check_branch
      %21 = sbr.rel (0) target = $region17
    $region16: #{tpu_custom_call.1} parent=1 // pred_region
      _
    $region17: #{tpu_custom_call.1} parent=1 // pred_fallthru
      _
    // Predicated region
    $region18: #{tpu_custom_call.1} parent=1 // pred_check
      _
    $region19: #{tpu_custom_call.1} parent=1 // pred_check_branch
      %23 = sbr.rel (0) target = $region21
    $region20: #{tpu_custom_call.1} parent=1 // pred_region
      _
    $region21: #{tpu_custom_call.1} parent=1 // pred_fallthru
      _
    %p25 = scmp.eq.s32.totalorder 0, 0
    // Predicated region
    $region22: #{tpu_custom_call.1} parent=1 // pred_check
      %p26 = pneg %p25
    $region23: #{tpu_custom_call.1} parent=1 // pred_check_branch
      %28 = sbr.rel (%p26) target = $region25
    $region24: #{tpu_custom_call.1} parent=1 // pred_region
      %vm29 = vcmask 254976
      %30 = vst.msk [vmem:[#allocation2] sm:$0x3] %vm29, 0.0
    $region25: #{tpu_custom_call.1} parent=1 // pred_fallthru
      _
    %v31 = vld [vmem:[%s0] sm:$0xf]
    %v32 = vld [vmem:[%s0 + $0x4] sm:$0xf]
    %v33 = vld [vmem:[%s0 + $0x8] sm:$0xf]
    %v34 = vld [vmem:[%s0 + $0xc] sm:$0xf]
    %v35 = vld [vmem:[%s0 + $0x10] sm:$0xf]
    %v36 = vld [vmem:[%s0 + $0x14] sm:$0xf]
    %v37 = vld [vmem:[%s0 + $0x18] sm:$0xf]
    %v38 = vld [vmem:[%s0 + $0x1c] sm:$0xf]
    %v39 = vld [vmem:[%s0 + $0x20] sm:$0xf]
    %v40 = vld [vmem:[%s0 + $0x24] sm:$0xf]
    %v41 = vld [vmem:[%s0 + $0x28] sm:$0xf]
    %v42 = vld [vmem:[%s0 + $0x2c] sm:$0xf]
    %v43 = vld [vmem:[%s0 + $0x30] sm:$0xf]
    %v44 = vld [vmem:[%s0 + $0x34] sm:$0xf]
    %v45 = vld [vmem:[%s0 + $0x38] sm:$0xf]
    %v46 = vld [vmem:[%s0 + $0x3c] sm:$0xf]
    %v47 = vld [vmem:[%s0 + $0x40] sm:$0xf]
    %v48 = vld [vmem:[%s0 + $0x44] sm:$0xf]
    %v49 = vld [vmem:[%s0 + $0x48] sm:$0xf]
    %v50 = vld [vmem:[%s0 + $0x4c] sm:$0xf]
    %v51 = vld [vmem:[%s0 + $0x50] sm:$0xf]
    %v52 = vld [vmem:[%s0 + $0x54] sm:$0xf]
    %v53 = vld [vmem:[%s0 + $0x58] sm:$0xf]
    %v54 = vld [vmem:[%s0 + $0x5c] sm:$0xf]
    %v55 = vld [vmem:[%s0 + $0x60] sm:$0xf]
    %v56 = vld [vmem:[%s0 + $0x64] sm:$0xf]
    %v57 = vld [vmem:[%s0 + $0x68] sm:$0xf]
    %v58 = vld [vmem:[%s0 + $0x6c] sm:$0xf]
    %v59 = vld [vmem:[%s0 + $0x70] sm:$0xf]
    %v60 = vld [vmem:[%s0 + $0x74] sm:$0xf]
    %v61 = vld [vmem:[%s0 + $0x78] sm:$0xf]
    %v62 = vld [vmem:[%s0 + $0x7c] sm:$0xf]
    %v63 = vld [vmem:[%s0 + $0x80] sm:$0xf]
    %v64 = vld [vmem:[%s0 + $0x84] sm:$0xf]
    %v65 = vld [vmem:[%s0 + $0x88] sm:$0xf]
    %v66 = vld [vmem:[%s0 + $0x8c] sm:$0xf]
    %v67 = vld [vmem:[%s0 + $0x90] sm:$0xf]
    %v68 = vld [vmem:[%s0 + $0x94] sm:$0xf]
    %v69 = vld [vmem:[%s0 + $0x98] sm:$0xf]
    %v70 = vld [vmem:[%s0 + $0x9c] sm:$0xf]
    %v71 = vld [vmem:[%s0 + $0xa0] sm:$0xf]
    %v72 = vld [vmem:[%s0 + $0xa4] sm:$0xf]
    %v73 = vld [vmem:[%s0 + $0xa8] sm:$0xf]
    %v74 = vld [vmem:[%s0 + $0xac] sm:$0xf]
    %v75 = vld [vmem:[%s0 + $0xb0] sm:$0xf]
    %v76 = vld [vmem:[%s0 + $0xb4] sm:$0xf]
    %v77 = vld [vmem:[%s0 + $0xb8] sm:$0xf]
    %v78 = vld [vmem:[%s0 + $0xbc] sm:$0xf]
    %v79 = vld [vmem:[%s0 + $0xc0] sm:$0xf]
    %v80 = vld [vmem:[%s0 + $0xc4] sm:$0xf]
    %v81 = vld [vmem:[%s0 + $0xc8] sm:$0xf]
    %v82 = vld [vmem:[%s0 + $0xcc] sm:$0xf]
    %v83 = vld [vmem:[%s0 + $0xd0] sm:$0xf]
    %v84 = vld [vmem:[%s0 + $0xd4] sm:$0xf]
    %v85 = vld [vmem:[%s0 + $0xd8] sm:$0xf]
    %v86 = vld [vmem:[%s0 + $0xdc] sm:$0xf]
    %v87 = vld [vmem:[%s0 + $0xe0] sm:$0xf]
    %v88 = vld [vmem:[%s0 + $0xe4] sm:$0xf]
    %v89 = vld [vmem:[%s0 + $0xe8] sm:$0xf]
    %v90 = vld [vmem:[%s0 + $0xec] sm:$0xf]
    %v91 = vld [vmem:[%s0 + $0xf0] sm:$0xf]
    %v92 = vld [vmem:[%s0 + $0xf4] sm:$0xf]
    %v93 = vld [vmem:[%s0 + $0xf8] sm:$0xf]
    %v94 = vld [vmem:[%s0 + $0xfc] sm:$0xf]
    %v95 = vld [vmem:[%s1] sm:$0xf]
    %v96 = vld [vmem:[%s1 + $0x4] sm:$0xf]
    %v97 = vld [vmem:[%s1 + $0x8] sm:$0xf]
    %v98 = vld [vmem:[%s1 + $0xc] sm:$0xf]
    %v99 = vld [vmem:[%s2] sm:$0x1]
    %v101 = vlaneseq
    %v102 = vshrl.u32 %v101, 7
    %v103 = vsub.s32 0, %v102
    %v104 = vrot.slane %v99, %v103
    %v170 = vunpack.c.l.b16 %v31
    %v171 = vunpack.c.l.b16 %v32
    %v172 = vunpack.c.l.b16 %v33
    %v173 = vunpack.c.l.b16 %v34
    %v174 = vunpack.c.l.b16 %v35
    %v175 = vunpack.c.l.b16 %v36
    %v176 = vunpack.c.l.b16 %v37
    %v177 = vunpack.c.l.b16 %v38
    %v178 = vunpack.c.l.b16 %v39
    %v179 = vunpack.c.l.b16 %v40
    %v180 = vunpack.c.l.b16 %v41
    %v181 = vunpack.c.l.b16 %v42
    %v182 = vunpack.c.l.b16 %v43
    %v183 = vunpack.c.l.b16 %v44
    %v184 = vunpack.c.l.b16 %v45
    %v185 = vunpack.c.l.b16 %v46
    %v186 = vunpack.c.l.b16 %v47
    %v187 = vunpack.c.l.b16 %v48
    %v188 = vunpack.c.l.b16 %v49
    %v189 = vunpack.c.l.b16 %v50
    %v190 = vunpack.c.l.b16 %v51
    %v191 = vunpack.c.l.b16 %v52
    %v192 = vunpack.c.l.b16 %v53
    %v193 = vunpack.c.l.b16 %v54
    %v194 = vunpack.c.l.b16 %v55
    %v195 = vunpack.c.l.b16 %v56
    %v196 = vunpack.c.l.b16 %v57
    %v197 = vunpack.c.l.b16 %v58
    %v198 = vunpack.c.l.b16 %v59
    %v199 = vunpack.c.l.b16 %v60
    %v200 = vunpack.c.l.b16 %v61
    %v201 = vunpack.c.l.b16 %v62
    %v202 = vunpack.c.l.b16 %v63
    %v203 = vunpack.c.l.b16 %v64
    %v204 = vunpack.c.l.b16 %v65
    %v205 = vunpack.c.l.b16 %v66
    %v206 = vunpack.c.l.b16 %v67
    %v207 = vunpack.c.l.b16 %v68
    %v208 = vunpack.c.l.b16 %v69
    %v209 = vunpack.c.l.b16 %v70
    %v210 = vunpack.c.l.b16 %v71
    %v211 = vunpack.c.l.b16 %v72
    %v212 = vunpack.c.l.b16 %v73
    %v213 = vunpack.c.l.b16 %v74
    %v214 = vunpack.c.l.b16 %v75
    %v215 = vunpack.c.l.b16 %v76
    %v216 = vunpack.c.l.b16 %v77
    %v217 = vunpack.c.l.b16 %v78
    %v218 = vunpack.c.l.b16 %v79
    %v219 = vunpack.c.l.b16 %v80
    %v220 = vunpack.c.l.b16 %v81
    %v221 = vunpack.c.l.b16 %v82
    %v222 = vunpack.c.l.b16 %v83
    %v223 = vunpack.c.l.b16 %v84
    %v224 = vunpack.c.l.b16 %v85
    %v225 = vunpack.c.l.b16 %v86
    %v226 = vunpack.c.l.b16 %v87
    %v227 = vunpack.c.l.b16 %v88
    %v228 = vunpack.c.l.b16 %v89
    %v229 = vunpack.c.l.b16 %v90
    %v230 = vunpack.c.l.b16 %v91
    %v231 = vunpack.c.l.b16 %v92
    %v232 = vunpack.c.l.b16 %v93
    %v233 = vunpack.c.l.b16 %v94
    %v234 = vpack.c.b16 %v171, %v170
    %v235 = vpack.c.b16 %v173, %v172
    %v236 = vpack.c.b16 %v175, %v174
    %v237 = vpack.c.b16 %v177, %v176
    %v238 = vpack.c.b16 %v179, %v178
    %v239 = vpack.c.b16 %v181, %v180
    %v240 = vpack.c.b16 %v183, %v182
    %v241 = vpack.c.b16 %v185, %v184
    %v242 = vpack.c.b16 %v187, %v186
    %v243 = vpack.c.b16 %v189, %v188
    %v244 = vpack.c.b16 %v191, %v190
    %v245 = vpack.c.b16 %v193, %v192
    %v246 = vpack.c.b16 %v195, %v194
    %v247 = vpack.c.b16 %v197, %v196
    %v248 = vpack.c.b16 %v199, %v198
    %v249 = vpack.c.b16 %v201, %v200
    %v250 = vpack.c.b16 %v203, %v202
    %v251 = vpack.c.b16 %v205, %v204
    %v252 = vpack.c.b16 %v207, %v206
    %v253 = vpack.c.b16 %v209, %v208
    %v254 = vpack.c.b16 %v211, %v210
    %v255 = vpack.c.b16 %v213, %v212
    %v256 = vpack.c.b16 %v215, %v214
    %v257 = vpack.c.b16 %v217, %v216
    %v258 = vpack.c.b16 %v219, %v218
    %v259 = vpack.c.b16 %v221, %v220
    %v260 = vpack.c.b16 %v223, %v222
    %v261 = vpack.c.b16 %v225, %v224
    %v262 = vpack.c.b16 %v227, %v226
    %v263 = vpack.c.b16 %v229, %v228
    %v264 = vpack.c.b16 %v231, %v230
    %v265 = vpack.c.b16 %v233, %v232
    %v270 = vunpack.c.l.b16 %v95
    %v271 = vunpack.c.l.b16 %v96
    %v272 = vunpack.c.l.b16 %v97
    %v273 = vunpack.c.l.b16 %v98
    %v274 = vpack.c.b16 %v271, %v270
    %v275 = vpack.c.b16 %v273, %v272
    %vm278 = vcmask 261120
    %v280 = vsel %vm278, %v234, 0
    %v283 = vsel %vm278, %v235, 0
    %v286 = vsel %vm278, %v236, 0
    %v289 = vsel %vm278, %v237, 0
    %v292 = vsel %vm278, %v238, 0
    %v295 = vsel %vm278, %v239, 0
    %v298 = vsel %vm278, %v240, 0
    %v301 = vsel %vm278, %v241, 0
    %v304 = vsel %vm278, %v242, 0
    %v307 = vsel %vm278, %v243, 0
    %v310 = vsel %vm278, %v244, 0
    %v313 = vsel %vm278, %v245, 0
    %v316 = vsel %vm278, %v246, 0
    %v319 = vsel %vm278, %v247, 0
    %v322 = vsel %vm278, %v248, 0
    %v325 = vsel %vm278, %v249, 0
    %v328 = vsel %vm278, %v250, 0
    %v331 = vsel %vm278, %v251, 0
    %v334 = vsel %vm278, %v252, 0
    %v337 = vsel %vm278, %v253, 0
    %v340 = vsel %vm278, %v254, 0
    %v343 = vsel %vm278, %v255, 0
    %v346 = vsel %vm278, %v256, 0
    %v349 = vsel %vm278, %v257, 0
    %v352 = vsel %vm278, %v258, 0
    %v355 = vsel %vm278, %v259, 0
    %v358 = vsel %vm278, %v260, 0
    %v361 = vsel %vm278, %v261, 0
    %v364 = vsel %vm278, %v262, 0
    %v367 = vsel %vm278, %v263, 0
    %v370 = vsel %vm278, %v264, 0
    %v373 = vsel %vm278, %v265, 0
    %375 = vmatprep.subr.bf16.mxu0 0
    %376 = vmatpush1.bf16.msra.mxu0 %v274
    %377 = vmatprep.subr.bf16.mxu0 0
    %378 = vmatpush1.bf16.msra.mxu0 %v275
    %379 = vmatprep.subr.bf16.mxu0 0
    %380 = vmatpush1.bf16.msra.mxu0 0
    %381 = vmatprep.subr.bf16.mxu0 0
    %382 = vmatpush1.bf16.msra.mxu0 0
    %383 = vmatprep.subr.bf16.mxu0 0
    %384 = vmatpush1.bf16.msra.mxu0 0
    %385 = vmatprep.subr.bf16.mxu0 0
    %386 = vmatpush1.bf16.msra.mxu0 0
    %387 = vmatprep.subr.bf16.mxu0 0
    %388 = vmatpush1.bf16.msra.mxu0 0
    %389 = vmatprep.subr.bf16.mxu0 0
    %390 = vmatpush1.bf16.msra.mxu0 0
    %391 = vmatprep.subr.bf16.mxu0 0
    %392 = vmatpush1.bf16.msra.mxu0 0
    %393 = vmatprep.subr.bf16.mxu0 0
    %394 = vmatpush1.bf16.msra.mxu0 0
    %395 = vmatprep.subr.bf16.mxu0 0
    %396 = vmatpush1.bf16.msra.mxu0 0
    %397 = vmatprep.subr.bf16.mxu0 0
    %398 = vmatpush1.bf16.msra.mxu0 0
    %399 = vmatprep.subr.bf16.mxu0 0
    %400 = vmatpush1.bf16.msra.mxu0 0
    %401 = vmatprep.subr.bf16.mxu0 0
    %402 = vmatpush1.bf16.msra.mxu0 0
    %403 = vmatprep.subr.bf16.mxu0 0
    %404 = vmatpush1.bf16.msra.mxu0 0
    %405 = vmatprep.subr.bf16.mxu0 0
    %406 = vmatpush1.bf16.msra.mxu0 0
    %407 = vmatprep.mubr.bf16.mxu0 0
    %408 = vmatmul.mubr.bf16.gmra.mrb[0].mxu0 %v280
    %v409 = vpop.f32.mrb[0].mxu0
    %v410 = vadd.f32 %v104, %v409
    %v411 = vpop.f32.mrb[0].mxu0
    %v412 = vpop.f32.mrb[0].mxu0
    %v413 = vadd.f32 %v104, %v412
    %v414 = vpop.f32.mrb[0].mxu0
    %415 = vmatprep.mubr.bf16.mxu0 0
    %416 = vmatmul.mubr.bf16.gmra.mrb[0].mxu0 %v283
    %v417 = vpop.f32.mrb[0].mxu0
    %v418 = vadd.f32 %v104, %v417
    %v419 = vpop.f32.mrb[0].mxu0
    %v420 = vpop.f32.mrb[0].mxu0
    %v421 = vadd.f32 %v104, %v420
    %v422 = vpop.f32.mrb[0].mxu0
    %423 = vmatprep.mubr.bf16.mxu0 0
    %424 = vmatmul.mubr.bf16.gmra.mrb[0].mxu0 %v286
    %v425 = vpop.f32.mrb[0].mxu0
    %v426 = vadd.f32 %v104, %v425
    %v427 = vpop.f32.mrb[0].mxu0
    %v428 = vpop.f32.mrb[0].mxu0
    %v429 = vadd.f32 %v104, %v428
    %v430 = vpop.f32.mrb[0].mxu0
    %431 = vmatprep.mubr.bf16.mxu0 0
    %432 = vmatmul.mubr.bf16.gmra.mrb[0].mxu0 %v289
    %v433 = vpop.f32.mrb[0].mxu0
    %v434 = vadd.f32 %v104, %v433
    %v435 = vpop.f32.mrb[0].mxu0
    %v436 = vpop.f32.mrb[0].mxu0
    %v437 = vadd.f32 %v104, %v436
    %v438 = vpop.f32.mrb[0].mxu0
    %439 = vmatprep.mubr.bf16.mxu0 0
    %440 = vmatmul.mubr.bf16.gmra.mrb[0].mxu0 %v292
    %v441 = vpop.f32.mrb[0].mxu0
    %v442 = vadd.f32 %v104, %v441
    %v443 = vpop.f32.mrb[0].mxu0
    %v444 = vpop.f32.mrb[0].mxu0
    %v445 = vadd.f32 %v104, %v444
    %v446 = vpop.f32.mrb[0].mxu0
    %447 = vmatprep.mubr.bf16.mxu0 0
    %448 = vmatmul.mubr.bf16.gmra.mrb[0].mxu0 %v295
    %v449 = vpop.f32.mrb[0].mxu0
    %v450 = vadd.f32 %v104, %v449
    %v451 = vpop.f32.mrb[0].mxu0
    %v452 = vpop.f32.mrb[0].mxu0
    %v453 = vadd.f32 %v104, %v452
    %v454 = vpop.f32.mrb[0].mxu0
    %455 = vmatprep.mubr.bf16.mxu0 0
    %456 = vmatmul.mubr.bf16.gmra.mrb[0].mxu0 %v298
    %v457 = vpop.f32.mrb[0].mxu0
    %v458 = vadd.f32 %v104, %v457
    %v459 = vpop.f32.mrb[0].mxu0
    %v460 = vpop.f32.mrb[0].mxu0
    %v461 = vadd.f32 %v104, %v460
    %v462 = vpop.f32.mrb[0].mxu0
    %463 = vmatprep.mubr.bf16.mxu0 0
    %464 = vmatmul.mubr.bf16.gmra.mrb[0].mxu0 %v301
    %v465 = vpop.f32.mrb[0].mxu0
    %v466 = vadd.f32 %v104, %v465
    %v467 = vpop.f32.mrb[0].mxu0
    %v468 = vpop.f32.mrb[0].mxu0
    %v469 = vadd.f32 %v104, %v468
    %v470 = vpop.f32.mrb[0].mxu0
    %471 = vmatprep.mubr.bf16.mxu0 0
    %472 = vmatmul.mubr.bf16.gmra.mrb[0].mxu0 %v304
    %v473 = vpop.f32.mrb[0].mxu0
    %v474 = vadd.f32 %v104, %v473
    %v475 = vpop.f32.mrb[0].mxu0
    %v476 = vpop.f32.mrb[0].mxu0
    %v477 = vadd.f32 %v104, %v476
    %v478 = vpop.f32.mrb[0].mxu0
    %479 = vmatprep.mubr.bf16.mxu0 0
    %480 = vmatmul.mubr.bf16.gmra.mrb[0].mxu0 %v307
    %v481 = vpop.f32.mrb[0].mxu0
    %v482 = vadd.f32 %v104, %v481
    %v483 = vpop.f32.mrb[0].mxu0
    %v484 = vpop.f32.mrb[0].mxu0
    %v485 = vadd.f32 %v104, %v484
    %v486 = vpop.f32.mrb[0].mxu0
    %487 = vmatprep.mubr.bf16.mxu0 0
    %488 = vmatmul.mubr.bf16.gmra.mrb[0].mxu0 %v310
    %v489 = vpop.f32.mrb[0].mxu0
    %v490 = vadd.f32 %v104, %v489
    %v491 = vpop.f32.mrb[0].mxu0
    %v492 = vpop.f32.mrb[0].mxu0
    %v493 = vadd.f32 %v104, %v492
    %v494 = vpop.f32.mrb[0].mxu0
    %495 = vmatprep.mubr.bf16.mxu0 0
    %496 = vmatmul.mubr.bf16.gmra.mrb[0].mxu0 %v313
    %v497 = vpop.f32.mrb[0].mxu0
    %v498 = vadd.f32 %v104, %v497
    %v499 = vpop.f32.mrb[0].mxu0
    %v500 = vpop.f32.mrb[0].mxu0
    %v501 = vadd.f32 %v104, %v500
    %v502 = vpop.f32.mrb[0].mxu0
    %503 = vmatprep.mubr.bf16.mxu0 0
    %504 = vmatmul.mubr.bf16.gmra.mrb[0].mxu0 %v316
    %v505 = vpop.f32.mrb[0].mxu0
    %v506 = vadd.f32 %v104, %v505
    %v507 = vpop.f32.mrb[0].mxu0
    %v508 = vpop.f32.mrb[0].mxu0
    %v509 = vadd.f32 %v104, %v508
    %v510 = vpop.f32.mrb[0].mxu0
    %511 = vmatprep.mubr.bf16.mxu0 0
    %512 = vmatmul.mubr.bf16.gmra.mrb[0].mxu0 %v319
    %v513 = vpop.f32.mrb[0].mxu0
    %v514 = vadd.f32 %v104, %v513
    %v515 = vpop.f32.mrb[0].mxu0
    %v516 = vpop.f32.mrb[0].mxu0
    %v517 = vadd.f32 %v104, %v516
    %v518 = vpop.f32.mrb[0].mxu0
    %519 = vmatprep.mubr.bf16.mxu0 0
    %520 = vmatmul.mubr.bf16.gmra.mrb[0].mxu0 %v322
    %v521 = vpop.f32.mrb[0].mxu0
    %v522 = vadd.f32 %v104, %v521
    %v523 = vpop.f32.mrb[0].mxu0
    %v524 = vpop.f32.mrb[0].mxu0
    %v525 = vadd.f32 %v104, %v524
    %v526 = vpop.f32.mrb[0].mxu0
    %527 = vmatprep.mubr.bf16.mxu0 0
    %528 = vmatmul.mubr.bf16.gmra.mrb[0].mxu0 %v325
    %v529 = vpop.f32.mrb[0].mxu0
    %v530 = vadd.f32 %v104, %v529
    %v531 = vpop.f32.mrb[0].mxu0
    %v532 = vpop.f32.mrb[0].mxu0
    %v533 = vadd.f32 %v104, %v532
    %v534 = vpop.f32.mrb[0].mxu0
    %535 = vmatprep.mubr.bf16.mxu0 0
    %536 = vmatmul.mubr.bf16.gmra.mrb[0].mxu0 %v328
    %v537 = vpop.f32.mrb[0].mxu0
    %v538 = vadd.f32 %v104, %v537
    %v539 = vpop.f32.mrb[0].mxu0
    %v540 = vpop.f32.mrb[0].mxu0
    %v541 = vadd.f32 %v104, %v540
    %v542 = vpop.f32.mrb[0].mxu0
    %543 = vmatprep.mubr.bf16.mxu0 0
    %544 = vmatmul.mubr.bf16.gmra.mrb[0].mxu0 %v331
    %v545 = vpop.f32.mrb[0].mxu0
    %v546 = vadd.f32 %v104, %v545
    %v547 = vpop.f32.mrb[0].mxu0
    %v548 = vpop.f32.mrb[0].mxu0
    %v549 = vadd.f32 %v104, %v548
    %v550 = vpop.f32.mrb[0].mxu0
    %551 = vmatprep.mubr.bf16.mxu0 0
    %552 = vmatmul.mubr.bf16.gmra.mrb[0].mxu0 %v334
    %v553 = vpop.f32.mrb[0].mxu0
    %v554 = vadd.f32 %v104, %v553
    %v555 = vpop.f32.mrb[0].mxu0
    %v556 = vpop.f32.mrb[0].mxu0
    %v557 = vadd.f32 %v104, %v556
    %v558 = vpop.f32.mrb[0].mxu0
    %559 = vmatprep.mubr.bf16.mxu0 0
    %560 = vmatmul.mubr.bf16.gmra.mrb[0].mxu0 %v337
    %v561 = vpop.f32.mrb[0].mxu0
    %v562 = vadd.f32 %v104, %v561
    %v563 = vpop.f32.mrb[0].mxu0
    %v564 = vpop.f32.mrb[0].mxu0
    %v565 = vadd.f32 %v104, %v564
    %v566 = vpop.f32.mrb[0].mxu0
    %567 = vmatprep.mubr.bf16.mxu0 0
    %568 = vmatmul.mubr.bf16.gmra.mrb[0].mxu0 %v340
    %v569 = vpop.f32.mrb[0].mxu0
    %v570 = vadd.f32 %v104, %v569
    %v571 = vpop.f32.mrb[0].mxu0
    %v572 = vpop.f32.mrb[0].mxu0
    %v573 = vadd.f32 %v104, %v572
    %v574 = vpop.f32.mrb[0].mxu0
    %575 = vmatprep.mubr.bf16.mxu0 0
    %576 = vmatmul.mubr.bf16.gmra.mrb[0].mxu0 %v343
    %v577 = vpop.f32.mrb[0].mxu0
    %v578 = vadd.f32 %v104, %v577
    %v579 = vpop.f32.mrb[0].mxu0
    %v580 = vpop.f32.mrb[0].mxu0
    %v581 = vadd.f32 %v104, %v580
    %v582 = vpop.f32.mrb[0].mxu0
    %583 = vmatprep.mubr.bf16.mxu0 0
    %584 = vmatmul.mubr.bf16.gmra.mrb[0].mxu0 %v346
    %v585 = vpop.f32.mrb[0].mxu0
    %v586 = vadd.f32 %v104, %v585
    %v587 = vpop.f32.mrb[0].mxu0
    %v588 = vpop.f32.mrb[0].mxu0
    %v589 = vadd.f32 %v104, %v588
    %v590 = vpop.f32.mrb[0].mxu0
    %591 = vmatprep.mubr.bf16.mxu0 0
    %592 = vmatmul.mubr.bf16.gmra.mrb[0].mxu0 %v349
    %v593 = vpop.f32.mrb[0].mxu0
    %v594 = vadd.f32 %v104, %v593
    %v595 = vpop.f32.mrb[0].mxu0
    %v596 = vpop.f32.mrb[0].mxu0
    %v597 = vadd.f32 %v104, %v596
    %v598 = vpop.f32.mrb[0].mxu0
    %599 = vmatprep.mubr.bf16.mxu0 0
    %600 = vmatmul.mubr.bf16.gmra.mrb[0].mxu0 %v352
    %v601 = vpop.f32.mrb[0].mxu0
    %v602 = vadd.f32 %v104, %v601
    %v603 = vpop.f32.mrb[0].mxu0
    %v604 = vpop.f32.mrb[0].mxu0
    %v605 = vadd.f32 %v104, %v604
    %v606 = vpop.f32.mrb[0].mxu0
    %607 = vmatprep.mubr.bf16.mxu0 0
    %608 = vmatmul.mubr.bf16.gmra.mrb[0].mxu0 %v355
    %v609 = vpop.f32.mrb[0].mxu0
    %v610 = vadd.f32 %v104, %v609
    %v611 = vpop.f32.mrb[0].mxu0
    %v612 = vpop.f32.mrb[0].mxu0
    %v613 = vadd.f32 %v104, %v612
    %v614 = vpop.f32.mrb[0].mxu0
    %615 = vmatprep.mubr.bf16.mxu0 0
    %616 = vmatmul.mubr.bf16.gmra.mrb[0].mxu0 %v358
    %v617 = vpop.f32.mrb[0].mxu0
    %v618 = vadd.f32 %v104, %v617
    %v619 = vpop.f32.mrb[0].mxu0
    %v620 = vpop.f32.mrb[0].mxu0
    %v621 = vadd.f32 %v104, %v620
    %v622 = vpop.f32.mrb[0].mxu0
    %623 = vmatprep.mubr.bf16.mxu0 0
    %624 = vmatmul.mubr.bf16.gmra.mrb[0].mxu0 %v361
    %v625 = vpop.f32.mrb[0].mxu0
    %v626 = vadd.f32 %v104, %v625
    %v627 = vpop.f32.mrb[0].mxu0
    %v628 = vpop.f32.mrb[0].mxu0
    %v629 = vadd.f32 %v104, %v628
    %v630 = vpop.f32.mrb[0].mxu0
    %631 = vmatprep.mubr.bf16.mxu0 0
    %632 = vmatmul.mubr.bf16.gmra.mrb[0].mxu0 %v364
    %v633 = vpop.f32.mrb[0].mxu0
    %v634 = vadd.f32 %v104, %v633
    %v635 = vpop.f32.mrb[0].mxu0
    %v636 = vpop.f32.mrb[0].mxu0
    %v637 = vadd.f32 %v104, %v636
    %v638 = vpop.f32.mrb[0].mxu0
    %639 = vmatprep.mubr.bf16.mxu0 0
    %640 = vmatmul.mubr.bf16.gmra.mrb[0].mxu0 %v367
    %v641 = vpop.f32.mrb[0].mxu0
    %v642 = vadd.f32 %v104, %v641
    %v643 = vpop.f32.mrb[0].mxu0
    %v644 = vpop.f32.mrb[0].mxu0
    %v645 = vadd.f32 %v104, %v644
    %v646 = vpop.f32.mrb[0].mxu0
    %647 = vmatprep.mubr.bf16.mxu0 0
    %648 = vmatmul.mubr.bf16.gmra.mrb[0].mxu0 %v370
    %v649 = vpop.f32.mrb[0].mxu0
    %v650 = vadd.f32 %v104, %v649
    %v651 = vpop.f32.mrb[0].mxu0
    %v652 = vpop.f32.mrb[0].mxu0
    %v653 = vadd.f32 %v104, %v652
    %v654 = vpop.f32.mrb[0].mxu0
    %655 = vmatprep.mubr.bf16.mxu0 0
    %656 = vmatmul.mubr.bf16.gmra.mrb[0].mxu0 %v373
    %v657 = vpop.f32.mrb[0].mxu0
    %v658 = vadd.f32 %v104, %v657
    %v659 = vpop.f32.mrb[0].mxu0
    %v660 = vpop.f32.mrb[0].mxu0
    %v661 = vadd.f32 %v104, %v660
    %v662 = vpop.f32.mrb[0].mxu0
    %663 = vdwg.mxu0
    %vm664 = vcmp.gt.f32.partialorder %v410, 0.0
    %vm665 = vcmp.gt.f32.partialorder %v413, 0.0
    %vm666 = vcmp.gt.f32.partialorder %v418, 0.0
    %vm667 = vcmp.gt.f32.partialorder %v421, 0.0
    %vm668 = vcmp.gt.f32.partialorder %v426, 0.0
    %vm669 = vcmp.gt.f32.partialorder %v429, 0.0
    %vm670 = vcmp.gt.f32.partialorder %v434, 0.0
    %vm671 = vcmp.gt.f32.partialorder %v437, 0.0
    %vm672 = vcmp.gt.f32.partialorder %v442, 0.0
    %vm673 = vcmp.gt.f32.partialorder %v445, 0.0
    %vm674 = vcmp.gt.f32.partialorder %v450, 0.0
    %vm675 = vcmp.gt.f32.partialorder %v453, 0.0
    %vm676 = vcmp.gt.f32.partialorder %v458, 0.0
    %vm677 = vcmp.gt.f32.partialorder %v461, 0.0
    %vm678 = vcmp.gt.f32.partialorder %v466, 0.0
    %vm679 = vcmp.gt.f32.partialorder %v469, 0.0
    %vm680 = vcmp.gt.f32.partialorder %v474, 0.0
    %vm681 = vcmp.gt.f32.partialorder %v477, 0.0
    %vm682 = vcmp.gt.f32.partialorder %v482, 0.0
    %vm683 = vcmp.gt.f32.partialorder %v485, 0.0
    %vm684 = vcmp.gt.f32.partialorder %v490, 0.0
    %vm685 = vcmp.gt.f32.partialorder %v493, 0.0
    %vm686 = vcmp.gt.f32.partialorder %v498, 0.0
    %vm687 = vcmp.gt.f32.partialorder %v501, 0.0
    %vm688 = vcmp.gt.f32.partialorder %v506, 0.0
    %vm689 = vcmp.gt.f32.partialorder %v509, 0.0
    %vm690 = vcmp.gt.f32.partialorder %v514, 0.0
    %vm691 = vcmp.gt.f32.partialorder %v517, 0.0
    %vm692 = vcmp.gt.f32.partialorder %v522, 0.0
    %vm693 = vcmp.gt.f32.partialorder %v525, 0.0
    %vm694 = vcmp.gt.f32.partialorder %v530, 0.0
    %vm695 = vcmp.gt.f32.partialorder %v533, 0.0
    %vm696 = vcmp.gt.f32.partialorder %v538, 0.0
    %vm697 = vcmp.gt.f32.partialorder %v541, 0.0
    %vm698 = vcmp.gt.f32.partialorder %v546, 0.0
    %vm699 = vcmp.gt.f32.partialorder %v549, 0.0
    %vm700 = vcmp.gt.f32.partialorder %v554, 0.0
    %vm701 = vcmp.gt.f32.partialorder %v557, 0.0
    %vm702 = vcmp.gt.f32.partialorder %v562, 0.0
    %vm703 = vcmp.gt.f32.partialorder %v565, 0.0
    %vm704 = vcmp.gt.f32.partialorder %v570, 0.0
    %vm705 = vcmp.gt.f32.partialorder %v573, 0.0
    %vm706 = vcmp.gt.f32.partialorder %v578, 0.0
    %vm707 = vcmp.gt.f32.partialorder %v581, 0.0
    %vm708 = vcmp.gt.f32.partialorder %v586, 0.0
    %vm709 = vcmp.gt.f32.partialorder %v589, 0.0
    %vm710 = vcmp.gt.f32.partialorder %v594, 0.0
    %vm711 = vcmp.gt.f32.partialorder %v597, 0.0
    %vm712 = vcmp.gt.f32.partialorder %v602, 0.0
    %vm713 = vcmp.gt.f32.partialorder %v605, 0.0
    %vm714 = vcmp.gt.f32.partialorder %v610, 0.0
    %vm715 = vcmp.gt.f32.partialorder %v613, 0.0
    %vm716 = vcmp.gt.f32.partialorder %v618, 0.0
    %vm717 = vcmp.gt.f32.partialorder %v621, 0.0
    %vm718 = vcmp.gt.f32.partialorder %v626, 0.0
    %vm719 = vcmp.gt.f32.partialorder %v629, 0.0
    %vm720 = vcmp.gt.f32.partialorder %v634, 0.0
    %vm721 = vcmp.gt.f32.partialorder %v637, 0.0
    %vm722 = vcmp.gt.f32.partialorder %v642, 0.0
    %vm723 = vcmp.gt.f32.partialorder %v645, 0.0
    %vm724 = vcmp.gt.f32.partialorder %v650, 0.0
    %vm725 = vcmp.gt.f32.partialorder %v653, 0.0
    %vm726 = vcmp.gt.f32.partialorder %v658, 0.0
    %vm727 = vcmp.gt.f32.partialorder %v661, 0.0
    %v728 = vmul.f32 %v410, 0.2
    %v729 = vmul.f32 %v413, 0.2
    %v730 = vmul.f32 %v418, 0.2
    %v731 = vmul.f32 %v421, 0.2
    %v732 = vmul.f32 %v426, 0.2
    %v733 = vmul.f32 %v429, 0.2
    %v734 = vmul.f32 %v434, 0.2
    %v735 = vmul.f32 %v437, 0.2
    %v736 = vmul.f32 %v442, 0.2
    %v737 = vmul.f32 %v445, 0.2
    %v738 = vmul.f32 %v450, 0.2
    %v739 = vmul.f32 %v453, 0.2
    %v740 = vmul.f32 %v458, 0.2
    %v741 = vmul.f32 %v461, 0.2
    %v742 = vmul.f32 %v466, 0.2
    %v743 = vmul.f32 %v469, 0.2
    %v744 = vmul.f32 %v474, 0.2
    %v745 = vmul.f32 %v477, 0.2
    %v746 = vmul.f32 %v482, 0.2
    %v747 = vmul.f32 %v485, 0.2
    %v748 = vmul.f32 %v490, 0.2
    %v749 = vmul.f32 %v493, 0.2
    %v750 = vmul.f32 %v498, 0.2
    %v751 = vmul.f32 %v501, 0.2
    %v752 = vmul.f32 %v506, 0.2
    %v753 = vmul.f32 %v509, 0.2
    %v754 = vmul.f32 %v514, 0.2
    %v755 = vmul.f32 %v517, 0.2
    %v756 = vmul.f32 %v522, 0.2
    %v757 = vmul.f32 %v525, 0.2
    %v758 = vmul.f32 %v530, 0.2
    %v759 = vmul.f32 %v533, 0.2
    %v760 = vmul.f32 %v538, 0.2
    %v761 = vmul.f32 %v541, 0.2
    %v762 = vmul.f32 %v546, 0.2
    %v763 = vmul.f32 %v549, 0.2
    %v764 = vmul.f32 %v554, 0.2
    %v765 = vmul.f32 %v557, 0.2
    %v766 = vmul.f32 %v562, 0.2
    %v767 = vmul.f32 %v565, 0.2
    %v768 = vmul.f32 %v570, 0.2
    %v769 = vmul.f32 %v573, 0.2
    %v770 = vmul.f32 %v578, 0.2
    %v771 = vmul.f32 %v581, 0.2
    %v772 = vmul.f32 %v586, 0.2
    %v773 = vmul.f32 %v589, 0.2
    %v774 = vmul.f32 %v594, 0.2
    %v775 = vmul.f32 %v597, 0.2
    %v776 = vmul.f32 %v602, 0.2
    %v777 = vmul.f32 %v605, 0.2
    %v778 = vmul.f32 %v610, 0.2
    %v779 = vmul.f32 %v613, 0.2
    %v780 = vmul.f32 %v618, 0.2
    %v781 = vmul.f32 %v621, 0.2
    %v782 = vmul.f32 %v626, 0.2
    %v783 = vmul.f32 %v629, 0.2
    %v784 = vmul.f32 %v634, 0.2
    %v785 = vmul.f32 %v637, 0.2
    %v786 = vmul.f32 %v642, 0.2
    %v787 = vmul.f32 %v645, 0.2
    %v788 = vmul.f32 %v650, 0.2
    %v789 = vmul.f32 %v653, 0.2
    %v790 = vmul.f32 %v658, 0.2
    %v791 = vmul.f32 %v661, 0.2
    %v792 = vsel %vm664, %v410, %v728
    %v793 = vsel %vm665, %v413, %v729
    %v794 = vsel %vm666, %v418, %v730
    %v795 = vsel %vm667, %v421, %v731
    %v796 = vsel %vm668, %v426, %v732
    %v797 = vsel %vm669, %v429, %v733
    %v798 = vsel %vm670, %v434, %v734
    %v799 = vsel %vm671, %v437, %v735
    %v800 = vsel %vm672, %v442, %v736
    %v801 = vsel %vm673, %v445, %v737
    %v802 = vsel %vm674, %v450, %v738
    %v803 = vsel %vm675, %v453, %v739
    %v804 = vsel %vm676, %v458, %v740
    %v805 = vsel %vm677, %v461, %v741
    %v806 = vsel %vm678, %v466, %v742
    %v807 = vsel %vm679, %v469, %v743
    %v808 = vsel %vm680, %v474, %v744
    %v809 = vsel %vm681, %v477, %v745
    %v810 = vsel %vm682, %v482, %v746
    %v811 = vsel %vm683, %v485, %v747
    %v812 = vsel %vm684, %v490, %v748
    %v813 = vsel %vm685, %v493, %v749
    %v814 = vsel %vm686, %v498, %v750
    %v815 = vsel %vm687, %v501, %v751
    %v816 = vsel %vm688, %v506, %v752
    %v817 = vsel %vm689, %v509, %v753
    %v818 = vsel %vm690, %v514, %v754
    %v819 = vsel %vm691, %v517, %v755
    %v820 = vsel %vm692, %v522, %v756
    %v821 = vsel %vm693, %v525, %v757
    %v822 = vsel %vm694, %v530, %v758
    %v823 = vsel %vm695, %v533, %v759
    %v824 = vsel %vm696, %v538, %v760
    %v825 = vsel %vm697, %v541, %v761
    %v826 = vsel %vm698, %v546, %v762
    %v827 = vsel %vm699, %v549, %v763
    %v828 = vsel %vm700, %v554, %v764
    %v829 = vsel %vm701, %v557, %v765
    %v830 = vsel %vm702, %v562, %v766
    %v831 = vsel %vm703, %v565, %v767
    %v832 = vsel %vm704, %v570, %v768
    %v833 = vsel %vm705, %v573, %v769
    %v834 = vsel %vm706, %v578, %v770
    %v835 = vsel %vm707, %v581, %v771
    %v836 = vsel %vm708, %v586, %v772
    %v837 = vsel %vm709, %v589, %v773
    %v838 = vsel %vm710, %v594, %v774
    %v839 = vsel %vm711, %v597, %v775
    %v840 = vsel %vm712, %v602, %v776
    %v841 = vsel %vm713, %v605, %v777
    %v842 = vsel %vm714, %v610, %v778
    %v843 = vsel %vm715, %v613, %v779
    %v844 = vsel %vm716, %v618, %v780
    %v845 = vsel %vm717, %v621, %v781
    %v846 = vsel %vm718, %v626, %v782
    %v847 = vsel %vm719, %v629, %v783
    %v848 = vsel %vm720, %v634, %v784
    %v849 = vsel %vm721, %v637, %v785
    %v850 = vsel %vm722, %v642, %v786
    %v851 = vsel %vm723, %v645, %v787
    %v852 = vsel %vm724, %v650, %v788
    %v853 = vsel %vm725, %v653, %v789
    %v854 = vsel %vm726, %v658, %v790
    %v855 = vsel %vm727, %v661, %v791
    %v856 = vld [vmem:[#allocation2] sm:$0x3]
    %v857 = vsel %vm278, %v792, 0.0
    %v858 = vsel %vm278, %v793, 0.0
    %v859 = vadd.f32 %v857, %v858
    %v860 = vsel %vm278, %v794, 0.0
    %v861 = vadd.f32 %v859, %v860
    %v862 = vsel %vm278, %v795, 0.0
    %v863 = vadd.f32 %v861, %v862
    %v864 = vsel %vm278, %v796, 0.0
    %v865 = vadd.f32 %v863, %v864
    %v866 = vsel %vm278, %v797, 0.0
    %v867 = vadd.f32 %v865, %v866
    %v868 = vsel %vm278, %v798, 0.0
    %v869 = vadd.f32 %v867, %v868
    %v870 = vsel %vm278, %v799, 0.0
    %v871 = vadd.f32 %v869, %v870
    %v872 = vsel %vm278, %v800, 0.0
    %v873 = vadd.f32 %v871, %v872
    %v874 = vsel %vm278, %v801, 0.0
    %v875 = vadd.f32 %v873, %v874
    %v876 = vsel %vm278, %v802, 0.0
    %v877 = vadd.f32 %v875, %v876
    %v878 = vsel %vm278, %v803, 0.0
    %v879 = vadd.f32 %v877, %v878
    %v880 = vsel %vm278, %v804, 0.0
    %v881 = vadd.f32 %v879, %v880
    %v882 = vsel %vm278, %v805, 0.0
    %v883 = vadd.f32 %v881, %v882
    %v884 = vsel %vm278, %v806, 0.0
    %v885 = vadd.f32 %v883, %v884
    %v886 = vsel %vm278, %v807, 0.0
    %v887 = vadd.f32 %v885, %v886
    %v888 = vsel %vm278, %v808, 0.0
    %v889 = vadd.f32 %v887, %v888
    %v890 = vsel %vm278, %v809, 0.0
    %v891 = vadd.f32 %v889, %v890
    %v892 = vsel %vm278, %v810, 0.0
    %v893 = vadd.f32 %v891, %v892
    %v894 = vsel %vm278, %v811, 0.0
    %v895 = vadd.f32 %v893, %v894
    %v896 = vsel %vm278, %v812, 0.0
    %v897 = vadd.f32 %v895, %v896
    %v898 = vsel %vm278, %v813, 0.0
    %v899 = vadd.f32 %v897, %v898
    %v900 = vsel %vm278, %v814, 0.0
    %v901 = vadd.f32 %v899, %v900
    %v902 = vsel %vm278, %v815, 0.0
    %v903 = vadd.f32 %v901, %v902
    %v904 = vsel %vm278, %v816, 0.0
    %v905 = vadd.f32 %v903, %v904
    %v906 = vsel %vm278, %v817, 0.0
    %v907 = vadd.f32 %v905, %v906
    %v908 = vsel %vm278, %v818, 0.0
    %v909 = vadd.f32 %v907, %v908
    %v910 = vsel %vm278, %v819, 0.0
    %v911 = vadd.f32 %v909, %v910
    %v912 = vsel %vm278, %v820, 0.0
    %v913 = vadd.f32 %v911, %v912
    %v914 = vsel %vm278, %v821, 0.0
    %v915 = vadd.f32 %v913, %v914
    %v916 = vsel %vm278, %v822, 0.0
    %v917 = vadd.f32 %v915, %v916
    %v918 = vsel %vm278, %v823, 0.0
    %v919 = vadd.f32 %v917, %v918
    %v920 = vrot.slane %v919, 4
    %v921 = vadd.f32 %v919, %v920
    %v922 = vrot.slane %v921, 2
    %v923 = vadd.f32 %v921, %v922
    %v924 = vrot.slane %v923, 1
    %v925 = vadd.f32 %v923, %v924
    %v926 = vsel %vm278, %v824, 0.0
    %v927 = vsel %vm278, %v825, 0.0
    %v928 = vadd.f32 %v926, %v927
    %v929 = vsel %vm278, %v826, 0.0
    %v930 = vadd.f32 %v928, %v929
    %v931 = vsel %vm278, %v827, 0.0
    %v932 = vadd.f32 %v930, %v931
    %v933 = vsel %vm278, %v828, 0.0
    %v934 = vadd.f32 %v932, %v933
    %v935 = vsel %vm278, %v829, 0.0
    %v936 = vadd.f32 %v934, %v935
    %v937 = vsel %vm278, %v830, 0.0
    %v938 = vadd.f32 %v936, %v937
    %v939 = vsel %vm278, %v831, 0.0
    %v940 = vadd.f32 %v938, %v939
    %v941 = vsel %vm278, %v832, 0.0
    %v942 = vadd.f32 %v940, %v941
    %v943 = vsel %vm278, %v833, 0.0
    %v944 = vadd.f32 %v942, %v943
    %v945 = vsel %vm278, %v834, 0.0
    %v946 = vadd.f32 %v944, %v945
    %v947 = vsel %vm278, %v835, 0.0
    %v948 = vadd.f32 %v946, %v947
    %v949 = vsel %vm278, %v836, 0.0
    %v950 = vadd.f32 %v948, %v949
    %v951 = vsel %vm278, %v837, 0.0
    %v952 = vadd.f32 %v950, %v951
    %v953 = vsel %vm278, %v838, 0.0
    %v954 = vadd.f32 %v952, %v953
    %v955 = vsel %vm278, %v839, 0.0
    %v956 = vadd.f32 %v954, %v955
    %v957 = vsel %vm278, %v840, 0.0
    %v958 = vadd.f32 %v956, %v957
    %v959 = vsel %vm278, %v841, 0.0
    %v960 = vadd.f32 %v958, %v959
    %v961 = vsel %vm278, %v842, 0.0
    %v962 = vadd.f32 %v960, %v961
    %v963 = vsel %vm278, %v843, 0.0
    %v964 = vadd.f32 %v962, %v963
    %v965 = vsel %vm278, %v844, 0.0
    %v966 = vadd.f32 %v964, %v965
    %v967 = vsel %vm278, %v845, 0.0
    %v968 = vadd.f32 %v966, %v967
    %v969 = vsel %vm278, %v846, 0.0
    %v970 = vadd.f32 %v968, %v969
    %v971 = vsel %vm278, %v847, 0.0
    %v972 = vadd.f32 %v970, %v971
    %v973 = vsel %vm278, %v848, 0.0
    %v974 = vadd.f32 %v972, %v973
    %v975 = vsel %vm278, %v849, 0.0
    %v976 = vadd.f32 %v974, %v975
    %v977 = vsel %vm278, %v850, 0.0
    %v978 = vadd.f32 %v976, %v977
    %v979 = vsel %vm278, %v851, 0.0
    %v980 = vadd.f32 %v978, %v979
    %v981 = vsel %vm278, %v852, 0.0
    %v982 = vadd.f32 %v980, %v981
    %v983 = vsel %vm278, %v853, 0.0
    %v984 = vadd.f32 %v982, %v983
    %v985 = vsel %vm278, %v854, 0.0
    %v986 = vadd.f32 %v984, %v985
    %v987 = vsel %vm278, %v855, 0.0
    %v988 = vadd.f32 %v986, %v987
    %v989 = vrot.slane %v988, 4
    %v990 = vadd.f32 %v988, %v989
    %v991 = vrot.slane %v990, 2
    %v992 = vadd.f32 %v990, %v991
    %v993 = vrot.slane %v992, 1
    %v994 = vadd.f32 %v992, %v993
    %vm997 = vcmask 1041409
    %v998 = vsel %vm997, %v994, %v925
    %v1000 = vadd.f32 %v856, %v998
    %vm1001 = vcmask 254976
    %1002 = vst.msk [vmem:[#allocation2] sm:$0x3] %vm1001, %v1000
    // Predicated region
    $region26: #{tpu_custom_call.1} parent=1 // pred_check
      %p1003 = pneg %p25
    $region27: #{tpu_custom_call.1} parent=1 // pred_check_branch
      %1005 = sbr.rel (%p1003) target = $region29
    $region28: #{tpu_custom_call.1} parent=1 // pred_region
      %v1006 = vld [vmem:[#allocation2] sm:$0x3]
      %v1007 = vld [vmem:[%s3] sm:$0xff]
      %v1008 = vld [vmem:[%s3 + $0x8] sm:$0xff]
      %v1009 = vld [vmem:[%s3 + $0x10] sm:$0xff]
      %v1010 = vld [vmem:[%s3 + $0x18] sm:$0xff]
      %v1011 = vld [vmem:[%s3 + $0x20] sm:$0xff]
      %v1012 = vld [vmem:[%s3 + $0x28] sm:$0xff]
      %v1013 = vld [vmem:[%s3 + $0x30] sm:$0xff]
      %v1014 = vld [vmem:[%s3 + $0x38] sm:$0xff]
      %v1015 = vld [vmem:[%s4] sm:$0x3]
      %v1017 = vlaneseq
      %v1018 = vshrl.u32 %v1017, 7
      %v1019 = vsub.s32 0, %v1018
      %v1020 = vrot.slane %v1015, %v1019
      %v1021 = vlaneseq
      %v1022 = vshrl.u32 %v1021, 7
      %v1023 = vsub.s32 1, %v1022
      %v1024 = vrot.slane %v1015, %v1023
      %v1028 = vsel %vm278, %v1006, 0
      %1030 = vmatprep.subr.mxu0 %v1008
      %1031 = vmatpush1.msra.mxu0 %v1007
      %1032 = vmatprep.subr.mxu0 %v1010
      %1033 = vmatpush1.msra.mxu0 %v1009
      %1034 = vmatprep.subr.mxu0 %v1012
      %1035 = vmatpush1.msra.mxu0 %v1011
      %1036 = vmatprep.subr.mxu0 %v1014
      %1037 = vmatpush1.msra.mxu0 %v1013
      %1038 = vmatprep.subr.mxu0 0.0
      %1039 = vmatpush1.msra.mxu0 0.0
      %1040 = vmatprep.subr.mxu0 0.0
      %1041 = vmatpush1.msra.mxu0 0.0
      %1042 = vmatprep.subr.mxu0 0.0
      %1043 = vmatpush1.msra.mxu0 0.0
      %1044 = vmatprep.subr.mxu0 0.0
      %1045 = vmatpush1.msra.mxu0 0.0
      %1046 = vmatprep.subr.mxu0 0.0
      %1047 = vmatpush1.msra.mxu0 0.0
      %1048 = vmatprep.subr.mxu0 0.0
      %1049 = vmatpush1.msra.mxu0 0.0
      %1050 = vmatprep.subr.mxu0 0.0
      %1051 = vmatpush1.msra.mxu0 0.0
      %1052 = vmatprep.subr.mxu0 0.0
      %1053 = vmatpush1.msra.mxu0 0.0
      %1054 = vmatprep.subr.mxu0 0.0
      %1055 = vmatpush1.msra.mxu0 0.0
      %1056 = vmatprep.subr.mxu0 0.0
      %1057 = vmatpush1.msra.mxu0 0.0
      %1058 = vmatprep.subr.mxu0 0.0
      %1059 = vmatpush1.msra.mxu0 0.0
      %1060 = vmatprep.subr.mxu0 0.0
      %1061 = vmatpush1.msra.mxu0 0.0
      %1062 = vmatprep.subr.mxu0 0.0
      %1063 = vmatpush1.msra.mxu0 0.0
      %1064 = vmatprep.subr.mxu0 0.0
      %1065 = vmatpush1.msra.mxu0 0.0
      %1066 = vmatprep.subr.mxu0 0.0
      %1067 = vmatpush1.msra.mxu0 0.0
      %1068 = vmatprep.subr.mxu0 0.0
      %1069 = vmatpush1.msra.mxu0 0.0
      %1070 = vmatprep.subr.mxu0 0.0
      %1071 = vmatpush1.msra.mxu0 0.0
      %1072 = vmatprep.subr.mxu0 0.0
      %1073 = vmatpush1.msra.mxu0 0.0
      %1074 = vmatprep.subr.mxu0 0.0
      %1075 = vmatpush1.msra.mxu0 0.0
      %1076 = vmatprep.subr.mxu0 0.0
      %1077 = vmatpush1.msra.mxu0 0.0
      %1078 = vmatprep.subr.mxu0 0.0
      %1079 = vmatpush1.msra.mxu0 0.0
      %1080 = vmatprep.subr.mxu0 0.0
      %1081 = vmatpush1.msra.mxu0 0.0
      %1082 = vmatprep.subr.mxu0 0.0
      %1083 = vmatpush1.msra.mxu0 0.0
      %1084 = vmatprep.subr.mxu0 0.0
      %1085 = vmatpush1.msra.mxu0 0.0
      %1086 = vmatprep.subr.mxu0 0.0
      %1087 = vmatpush1.msra.mxu0 0.0
      %1088 = vmatprep.subr.mxu0 0.0
      %1089 = vmatpush1.msra.mxu0 0.0
      %1090 = vmatprep.subr.mxu0 0.0
      %1091 = vmatpush1.msra.mxu0 0.0
      %1092 = vmatprep.subr.mxu0 0.0
      %1093 = vmatpush1.msra.mxu0 0.0
      %1094 = vmatprep.mubr.f32.mxu0 0.0
      %1095 = vmatmul.mubr.f32.gmra.mrb[0].mxu0 %v1028
      %v1096 = vpop.f32.mrb[0].mxu0
      %v1097 = vadd.f32 %v1020, %v1096
      %v1098 = vpop.f32.mrb[0].mxu0
      %v1099 = vadd.f32 %v1024, %v1098
      %1100 = vdwg.mxu0
      %v1103 = vcombine.low %v1097, %v1099
      %v1105 = vunpack.c.l.s4 1983009808
      %v1106 = vunpack.c.0.s8 %v1105
      %v1107 = vlaneseq
      %v1108 = vshrl.u32 %v1107, 7
      %v1109 = vsub.s32 %v1106, %v1108
      %v1110 = vrot.slane %v1103, %v1109
      %1112 = vst [vmem:[#allocation3] sm:$0xf] %v1110
      %v1113 = vpack.c.bf16 %v1097, %v1097
      %v1114 = vpack.c.bf16 %v1099, %v1099
      %v1117 = vcombine.low %v1113, %v1114
      %v1119 = vunpack.c.l.s4 1966171168
      %v1120 = vunpack.c.0.s8 %v1119
      %v1121 = vlaneseq
      %v1122 = vshrl.u32 %v1121, 7
      %v1123 = vsub.s32 %v1120, %v1122
      %v1124 = vrot.slane %v1117, %v1123
      %v1126 = vunpack.c.l.s4 1966171168
      %v1127 = vunpack.c.0.s8 %v1126
      %v1128 = vlaneseq
      %v1129 = vshrl.u32 %v1128, 7
      %v1130 = vsub.s32 %v1127, %v1129
      %v1131 = vrot.slane %v1124, %v1130
      %1133 = vst [vmem:[#allocation5] sm:$0x3] %v1131
    $region29: #{tpu_custom_call.1} parent=1 // pred_fallthru
      _
    // Predicated region
    $region30: #{tpu_custom_call.1} parent=1 // pred_check
      _
    $region31: #{tpu_custom_call.1} parent=1 // pred_check_branch
      %1135 = sbr.rel (0) target = $region33
    $region32: #{tpu_custom_call.1} parent=1 // pred_region
      %s1137 = ssub.s32 64, 64
      %1138 = vsyncadd [#allocation4], %s1137
      %s1140 = sshll.u32 [#allocation3], 4
      %s1141 = int_to_ptr.vmem [resolvable:$true] %s1140
      %1143 = dma.vmem_to_hbm [thread:$0]  %s1141, 64, %s5, [#allocation4]
    $region33: #{tpu_custom_call.1} parent=1 // pred_fallthru
      _
    // Predicated region
    $region34: #{tpu_custom_call.1} parent=1 // pred_check
      _
    $region35: #{tpu_custom_call.1} parent=1 // pred_check_branch
      %1145 = sbr.rel (0) target = $region37
    $region36: #{tpu_custom_call.1} parent=1 // pred_region
      %s1147 = ssub.s32 32, 32
      %1148 = vsyncadd [#allocation6], %s1147
      %s1150 = sshll.u32 [#allocation5], 4
      %s1151 = int_to_ptr.vmem [resolvable:$true] %s1150
      %1153 = dma.vmem_to_hbm [thread:$0]  %s1151, 32, %s6, [#allocation6]
    $region37: #{tpu_custom_call.1} parent=1 // pred_fallthru
      _
    // Predicated region
    $region38: #{tpu_custom_call.1} parent=1 // pred_check
      _
    $region39: #{tpu_custom_call.1} parent=1 // pred_check_branch
      %1155 = sbr.rel (0) target = $region41
    $region40: #{tpu_custom_call.1} parent=1 // pred_region
      %1156 = dma.done [#allocation4], 64
    $region41: #{tpu_custom_call.1} parent=1 // pred_fallthru
      _
    // Predicated region
    $region42: #{tpu_custom_call.1} parent=1 // pred_check
      _
    $region43: #{tpu_custom_call.1} parent=1 // pred_check_branch
      %1158 = sbr.rel (0) target = $region45
    $region44: #{tpu_custom_call.1} parent=1 // pred_region
      %1159 = dma.done [#allocation6], 32
    $region45: #{tpu_custom_call.1} parent=1 // pred_fallthru
      _
    %1160 = vsyncpa [#allocation4], 1
    %1161 = vsyncpa [#allocation6], 1

</llo_original>
